<compile_context>
chip_gen: v6e
topology: v6e:2x2x1
jax: 0.10.0
libtpu: 0.0.40
codegen_flags: <defaults>
</compile_context>

<pallas_src>
import functools

import jax
import jax.numpy as jnp
from jax.experimental import pallas as pl
from jax.experimental.pallas import tpu as pltpu


def _round_up(n: int, m: int) -> int:
    return ((n + m - 1) // m) * m


def _pad2(a, shape):
    """Zero-pad a 2-D array up to `shape` (zeros keep padded lanes exactly 0 through the
    bias-add + ReLU, so they cannot leak into later layers)."""
    return jnp.pad(a, ((0, shape[0] - a.shape[0]), (0, shape[1] - a.shape[1])))


def mlp_kernel(x_ref, w1_ref, b1_ref, w2_ref, b2_ref, w3_ref, b3_ref, o_ref,
               *, compute_dtype):
    # Cast x in-kernel (no separate XLA cast pass over HBM); f32 accumulation throughout.
    x = x_ref[...].astype(compute_dtype)
    # Layer 1: Linear(in -> h1) + ReLU
    h = jnp.dot(x, w1_ref[...], preferred_element_type=jnp.float32)
    h = jnp.maximum(h + b1_ref[...], 0.0)
    # Layer 2: Linear(h1 -> h2) + ReLU
    h = jnp.dot(h.astype(compute_dtype), w2_ref[...],
                preferred_element_type=jnp.float32)
    h = jnp.maximum(h + b2_ref[...], 0.0)
    # Layer 3: Linear(h2 -> out), no trailing activation (module drops last ReLU)
    out = jnp.dot(h.astype(compute_dtype), w3_ref[...],
                  preferred_element_type=jnp.float32) + b3_ref[...]
    o_ref[...] = out.astype(o_ref.dtype)


def prepare_params(params, compute_dtype=jnp.bfloat16):
    """Pad feature dims to 128 lanes and cast weights once (hoisted out of the forward)."""
    (w1, b1), (w2, b2), (w3, b3) = params
    f_in = w1.shape[0]
    h1, h2, f_out = w1.shape[1], w2.shape[1], w3.shape[1]
    h1p, h2p, f_outp = (_round_up(d, 128) for d in (h1, h2, f_out))
    arrays = (
        _pad2(w1.astype(compute_dtype), (f_in, h1p)),
        _pad2(b1.astype(jnp.float32), (1, h1p)),
        _pad2(w2.astype(compute_dtype), (h1p, h2p)),
        _pad2(b2.astype(jnp.float32), (1, h2p)),
        _pad2(w3.astype(compute_dtype), (h2p, f_outp)),
        _pad2(b3.astype(jnp.float32), (1, f_outp)),
    )
    return {"arrays": arrays, "f_in": f_in, "f_out": f_out,
            "compute_dtype": compute_dtype}


def mlp_forward(x, prepared, *, tm_target=1024):
    """x: (B, C, H, W) or (B, F). `prepared` comes from prepare_params(). Returns (B, out)."""
    w1p, b1p, w2p, b2p, w3p, b3p = prepared["arrays"]
    f_in, f_out = prepared["f_in"], prepared["f_out"]
    compute_dtype = prepared["compute_dtype"]
    h1p, h2p, f_outp = w1p.shape[1], w2p.shape[1], w3p.shape[1]

    B = x.shape[0]
    x2d = x.reshape(B, -1)                       # torch's x.flatten(1); no wrapper cast
    assert x2d.shape[1] == f_in, (x2d.shape, f_in)

    # --- batch tiling: no row padding; ragged last block handled by Pallas ---
    if B <= tm_target:
        TM = B                                   # single full-dim block (always legal)
    else:
        n_steps = max(2, pl.cdiv(B, tm_target))  # >=2 steps so both v7x TCs get work
        TM = _round_up(pl.cdiv(B, n_steps), 8)
    grid = (pl.cdiv(B, TM),)

    def const_spec(shape):
        # weights/biases: same block every grid step -> stay resident in VMEM
        return pl.BlockSpec(shape, lambda i: (0, 0))

    in_specs = [
        pl.BlockSpec((TM, f_in), lambda i: (i, 0)),   # x tile, pipelined over batch
        const_spec(w1p.shape), const_spec(b1p.shape),
        const_spec(w2p.shape), const_spec(b2p.shape),
        const_spec(w3p.shape), const_spec(b3p.shape),
    ]
    out_specs = pl.BlockSpec((TM, f_outp), lambda i: (i, 0))

    # VMEM footprint estimate: x/out double buffers + resident weights + f32 intermediates.
    x_item = jnp.dtype(x2d.dtype).itemsize
    vmem_est = (2 * TM * f_in * x_item
                + 2 * TM * f_outp * 4
                + sum(a.size * a.dtype.itemsize for a in prepared["arrays"])
                + TM * (h1p + h2p + f_outp) * 4)
    compiler_kwargs = {"dimension_semantics": ("parallel",)}
    if vmem_est > 24 * 1024 * 1024:
        # Only needed for very large TM; capped for v7x's 64 MiB physical VMEM.
        compiler_kwargs["vmem_limit_bytes"] = min(int(vmem_est * 3 // 2), 48 * 1024 * 1024)

    flops = 2 * B * (f_in * h1p + h1p * h2p + h2p * f_outp)
    bytes_accessed = (x2d.size * x_item
                      + sum(a.size * a.dtype.itemsize for a in prepared["arrays"])
                      + B * f_outp * 4)
    cost = pl.CostEstimate(flops=int(flops), transcendentals=0,
                           bytes_accessed=int(bytes_accessed))

    out = pl.pallas_call(
        functools.partial(mlp_kernel, compute_dtype=compute_dtype),
        out_shape=jax.ShapeDtypeStruct((B, f_outp), jnp.float32),
        grid=grid,
        in_specs=in_specs,
        out_specs=out_specs,
        compiler_params=pltpu.CompilerParams(**compiler_kwargs),
        cost_estimate=cost,
    )(x2d, w1p, b1p, w2p, b2p, w3p, b3p)

    # Slice off the lane padding (downstream consumers that tolerate the padded (B,128)
    # buffer can skip this to save one pass over the output).
    return out[:, :f_out]


def init_params(key, in_features=784, out_features=10, hidden=(120, 84)):
    """Deterministic PyTorch-style init: U(-1/sqrt(fan_in), 1/sqrt(fan_in))."""
    dims = [in_features] + list(hidden) + [out_features]
    params = []
    for fan_in, fan_out in zip(dims[:-1], dims[1:]):
        key, kw, kb = jax.random.split(key, 3)
        bound = 1.0 / (fan_in ** 0.5)
        w = jax.random.uniform(kw, (fan_in, fan_out), jnp.float32, -bound, bound)
        b = jax.random.uniform(kb, (1, fan_out), jnp.float32, -bound, bound)
        params.append((w, b))
    return params


def mlp_reference(x, params):
    (w1, b1), (w2, b2), (w3, b3) = params
    h = x.reshape(x.shape[0], -1)
    h = jnp.maximum(h @ w1 + b1, 0.0)
    h = jnp.maximum(h @ w2 + b2, 0.0)
    return h @ w3 + b3


if __name__ == "__main__":
    key = jax.random.PRNGKey(0)
    k_param, k_x, k_x2 = jax.random.split(key, 3)

    params = init_params(k_param, in_features=784, out_features=10, hidden=(120, 84))

    # 1) f32-compute parity check vs. the pure-JAX reference (tight tolerance), B=2.
    x = jax.random.normal(k_x, (2, 1, 28, 28), dtype=jnp.float32)
    prep_f32 = prepare_params(params, compute_dtype=jnp.float32)
    out = jax.block_until_ready(mlp_forward(x, prep_f32))
    ref = mlp_reference(x, params)
    assert out.shape == (2, 10), out.shape
    assert jnp.allclose(out, ref, atol=1e-4, rtol=1e-4), "mismatch vs reference (f32, B=2)"

    # 2) Default bf16 compute path, multi-step grid with a ragged last block
    #    (B=300, tm_target=128 -> TM=104, grid=3, last block partially valid).
    prep_bf16 = prepare_params(params)            # compute_dtype defaults to bf16
    xb = jax.random.normal(k_x2, (300, 1, 28, 28), dtype=jnp.float32)
    outb = jax.block_until_ready(mlp_forward(xb, prep_bf16, tm_target=128))
    refb = mlp_reference(xb, params)
    assert outb.shape == (300, 10), outb.shape
    assert jnp.allclose(outb, refb, atol=5e-2, rtol=5e-2), "mismatch vs reference (bf16, B=300)"

    print("KERNEL_OK")
</pallas_src>

<mosaic_0001>
module attributes {stable_mosaic.version = 11 : i64} {
  func.func @mlp_kernel(%arg0: i32, %arg1: memref<2x784xf32, #tpu.memory_space<vmem>>, %arg2: memref<784x128xf32, #tpu.memory_space<vmem>>, %arg3: memref<1x128xf32, #tpu.memory_space<vmem>>, %arg4: memref<128x128xf32, #tpu.memory_space<vmem>>, %arg5: memref<1x128xf32, #tpu.memory_space<vmem>>, %arg6: memref<128x128xf32, #tpu.memory_space<vmem>>, %arg7: memref<1x128xf32, #tpu.memory_space<vmem>>, %arg8: memref<2x128xf32, #tpu.memory_space<vmem>>) attributes {dimension_semantics = [#tpu.dimension_semantics<parallel>], iteration_bounds = array<i64: 1>, scalar_prefetch = 0 : i64, scratch_operands = 0 : i64, tpu.core_type = #tpu.core_type<tc>, window_params = [{transform_indices = @transform_0, window_bounds = array<i64: 2, 784>}, {pipeline_mode = #tpu.pipeline_mode<synchronous>, transform_indices = @transform_1, window_bounds = array<i64: 784, 128>}, {pipeline_mode = #tpu.pipeline_mode<synchronous>, transform_indices = @transform_2, window_bounds = array<i64: 1, 128>}, {pipeline_mode = #tpu.pipeline_mode<synchronous>, transform_indices = @transform_3, window_bounds = array<i64: 128, 128>}, {pipeline_mode = #tpu.pipeline_mode<synchronous>, transform_indices = @transform_4, window_bounds = array<i64: 1, 128>}, {pipeline_mode = #tpu.pipeline_mode<synchronous>, transform_indices = @transform_5, window_bounds = array<i64: 128, 128>}, {pipeline_mode = #tpu.pipeline_mode<synchronous>, transform_indices = @transform_6, window_bounds = array<i64: 1, 128>}, {transform_indices = @transform_7, window_bounds = array<i64: 2, 128>}]} {
    %c0 = arith.constant 0 : index
    %c0_0 = arith.constant 0 : index
    %0 = vector.load %arg1[%c0, %c0_0] : memref<2x784xf32, #tpu.memory_space<vmem>>, vector<2x784xf32>
    %c0_1 = arith.constant 0 : index
    %c0_2 = arith.constant 0 : index
    %1 = vector.load %arg2[%c0_1, %c0_2] : memref<784x128xf32, #tpu.memory_space<vmem>>, vector<784x128xf32>
    %cst = arith.constant dense<0.000000e+00> : vector<2x128xf32>
    %2 = tpu.matmul %0, %1, %cst {dimension_numbers = #tpu.dot_dimension_numbers<[1], [0], [0], [1], [0, 0, 1, 1], [], []>} : vector<2x784xf32>, vector<784x128xf32>, vector<2x128xf32> -> vector<2x128xf32>
    %c0_3 = arith.constant 0 : index
    %c0_4 = arith.constant 0 : index
    %3 = vector.load %arg3[%c0_3, %c0_4] : memref<1x128xf32, #tpu.memory_space<vmem>>, vector<1x128xf32>
    %4 = vector.broadcast %3 : vector<1x128xf32> to vector<2x128xf32>
    %5 = arith.addf %2, %4 : vector<2x128xf32>
    %cst_5 = arith.constant 0.000000e+00 : f32
    %6 = vector.broadcast %cst_5 : f32 to vector<2x128xf32>
    %7 = arith.maximumf %5, %6 : vector<2x128xf32>
    %c0_6 = arith.constant 0 : index
    %c0_7 = arith.constant 0 : index
    %8 = vector.load %arg4[%c0_6, %c0_7] : memref<128x128xf32, #tpu.memory_space<vmem>>, vector<128x128xf32>
    %cst_8 = arith.constant dense<0.000000e+00> : vector<2x128xf32>
    %9 = tpu.matmul %7, %8, %cst_8 {dimension_numbers = #tpu.dot_dimension_numbers<[1], [0], [0], [1], [0, 0, 1, 1], [], []>} : vector<2x128xf32>, vector<128x128xf32>, vector<2x128xf32> -> vector<2x128xf32>
    %c0_9 = arith.constant 0 : index
    %c0_10 = arith.constant 0 : index
    %10 = vector.load %arg5[%c0_9, %c0_10] : memref<1x128xf32, #tpu.memory_space<vmem>>, vector<1x128xf32>
    %11 = vector.broadcast %10 : vector<1x128xf32> to vector<2x128xf32>
    %12 = arith.addf %9, %11 : vector<2x128xf32>
    %cst_11 = arith.constant 0.000000e+00 : f32
    %13 = vector.broadcast %cst_11 : f32 to vector<2x128xf32>
    %14 = arith.maximumf %12, %13 : vector<2x128xf32>
    %c0_12 = arith.constant 0 : index
    %c0_13 = arith.constant 0 : index
    %15 = vector.load %arg6[%c0_12, %c0_13] : memref<128x128xf32, #tpu.memory_space<vmem>>, vector<128x128xf32>
    %cst_14 = arith.constant dense<0.000000e+00> : vector<2x128xf32>
    %16 = tpu.matmul %14, %15, %cst_14 {dimension_numbers = #tpu.dot_dimension_numbers<[1], [0], [0], [1], [0, 0, 1, 1], [], []>} : vector<2x128xf32>, vector<128x128xf32>, vector<2x128xf32> -> vector<2x128xf32>
    %c0_15 = arith.constant 0 : index
    %c0_16 = arith.constant 0 : index
    %17 = vector.load %arg7[%c0_15, %c0_16] : memref<1x128xf32, #tpu.memory_space<vmem>>, vector<1x128xf32>
    %18 = vector.broadcast %17 : vector<1x128xf32> to vector<2x128xf32>
    %19 = arith.addf %16, %18 : vector<2x128xf32>
    %c0_17 = arith.constant 0 : index
    %c0_18 = arith.constant 0 : index
    %20 = vector.load %arg8[%c0_17, %c0_18] : memref<2x128xf32, #tpu.memory_space<vmem>>, vector<2x128xf32>
    tpu.vector_store %arg8[%c0_17, %c0_18], %19 {strides = array<i32>} : memref<2x128xf32, #tpu.memory_space<vmem>>, vector<2x128xf32>,
    return
  }
  func.func @transform_0(%arg0: i32) -> (i32, i32) {
    %c0_i32 = arith.constant 0 : i32
    %c0_i32_0 = arith.constant 0 : i32
    return %arg0, %c0_i32 : i32, i32
  }
  func.func @transform_1(%arg0: i32) -> (i32, i32) {
    %c0_i32 = arith.constant 0 : i32
    %c0_i32_0 = arith.constant 0 : i32
    %c0_i32_1 = arith.constant 0 : i32
    return %c0_i32, %c0_i32_0 : i32, i32
  }
  func.func @transform_2(%arg0: i32) -> (i32, i32) {
    %c0_i32 = arith.constant 0 : i32
    %c0_i32_0 = arith.constant 0 : i32
    %c0_i32_1 = arith.constant 0 : i32
    return %c0_i32, %c0_i32_0 : i32, i32
  }
  func.func @transform_3(%arg0: i32) -> (i32, i32) {
    %c0_i32 = arith.constant 0 : i32
    %c0_i32_0 = arith.constant 0 : i32
    %c0_i32_1 = arith.constant 0 : i32
    return %c0_i32, %c0_i32_0 : i32, i32
  }
  func.func @transform_4(%arg0: i32) -> (i32, i32) {
    %c0_i32 = arith.constant 0 : i32
    %c0_i32_0 = arith.constant 0 : i32
    %c0_i32_1 = arith.constant 0 : i32
    return %c0_i32, %c0_i32_0 : i32, i32
  }
  func.func @transform_5(%arg0: i32) -> (i32, i32) {
    %c0_i32 = arith.constant 0 : i32
    %c0_i32_0 = arith.constant 0 : i32
    %c0_i32_1 = arith.constant 0 : i32
    return %c0_i32, %c0_i32_0 : i32, i32
  }
  func.func @transform_6(%arg0: i32) -> (i32, i32) {
    %c0_i32 = arith.constant 0 : i32
    %c0_i32_0 = arith.constant 0 : i32
    %c0_i32_1 = arith.constant 0 : i32
    return %c0_i32, %c0_i32_0 : i32, i32
  }
  func.func @transform_7(%arg0: i32) -> (i32, i32) {
    %c0_i32 = arith.constant 0 : i32
    %c0_i32_0 = arith.constant 0 : i32
    return %arg0, %c0_i32 : i32, i32
  }
}

</mosaic_0001>

<llo_original>
// kernel: tpu_custom_call.1
$region0: #{tpu_custom_call.1}
  #allocation0 [shape = 'u32[]', space=smem, size = 0x4, offset = 0x4, fixed_abs, tag = 'smem constant byte address 0x4 - core index']
  #allocation1 [shape = 'u32[144,128]{1,0:T(1,128)}', space=vmem, size = 0x12000, scoped, tag = 'internal scratch']
  %s0 = inlined_call_operand.hbm [shape: f32[2,784], index: 0, kind: input, shape index: {}]
  %s1 = inlined_call_operand.hbm [shape: f32[784,128], index: 1, kind: input, shape index: {}]
  %s2 = inlined_call_operand.vmem [shape: f32[1,128], index: 2, kind: input, shape index: {}]
  %s3 = inlined_call_operand.hbm [shape: f32[128,128], index: 3, kind: input, shape index: {}]
  %s4 = inlined_call_operand.vmem [shape: f32[1,128], index: 4, kind: input, shape index: {}]
  %s5 = inlined_call_operand.hbm [shape: f32[128,128], index: 5, kind: input, shape index: {}]
  %s6 = inlined_call_operand.vmem [shape: f32[1,128], index: 6, kind: input, shape index: {}]
  %s7 = inlined_call_operand.hbm [shape: f32[2,128], index: 7, kind: output, shape index: {}]
  %s8 = sld [smem:[#allocation0]]
  $region54: #{tpu_custom_call.1} parent=0
    _
  %s10 = ssub.s32 1, %s8
  %s11 = scalar_select 0, %s10, %s8
  $region1: #{tpu_custom_call.1} parent=0
    #allocation2 [shape = 'u8[7168]{0}', space=vmem, size = 0x1c00, scoped, tag = 'input window, operand 0, single buffered']
    #allocation3 [shape = 's32[1]{0}', space=sflag, size = 0x4, scoped, tag = 'scoped memory for tpu_custom_call.1']
    #allocation4 [shape = 's32[1]{0}', space=sflag, size = 0x4, scoped, tag = 'scoped memory for tpu_custom_call.1']
    #allocation5 [shape = 'u8[401408]{0}', space=vmem, size = 0x62000, scoped, tag = 'input window, operand 1, single buffered']
    #allocation6 [shape = 's32[1]{0}', space=sflag, size = 0x4, scoped, tag = 'scoped memory for tpu_custom_call.1']
    #allocation7 [shape = 'u8[65536]{0}', space=vmem, size = 0x10000, scoped, tag = 'input window, operand 3, single buffered']
    #allocation8 [shape = 'u8[65536]{0}', space=vmem, size = 0x10000, scoped, tag = 'input window, operand 5, single buffered']
    #allocation9 [shape = 's32[1]{0}', space=sflag, size = 0x4, scoped, tag = 'scoped memory for tpu_custom_call.1']
    #allocation10 [shape = 'u8[1024]{0}', space=vmem, size = 0x400, scoped, tag = 'output window, operand 0, single buffered']
    %12 = vsyncpa [#allocation3], 0
    %13 = vsyncpa [#allocation6], 0
    %14 = vsyncpa [#allocation9], 0
    %15 = vsyncpa [#allocation4], 0
    // Predicated region
    $region2: #{tpu_custom_call.1} parent=1 // pred_check
      _
    $region3: #{tpu_custom_call.1} parent=1 // pred_check_branch
      %17 = sbr.rel (0) target = $region5
    $region4: #{tpu_custom_call.1} parent=1 // pred_region
      %s19 = ssub.s32 224, 224
      %20 = vsyncadd [#allocation3], %s19
      %s22 = sshll.u32 [#allocation2], 4
      %s23 = int_to_ptr.vmem [resolvable:$true] %s22
      %25 = dma.hbm_to_vmem [thread:$0]  %s0, 224, %s23, [#allocation3]
    $region5: #{tpu_custom_call.1} parent=1 // pred_fallthru
      _
    // Predicated region
    $region6: #{tpu_custom_call.1} parent=1 // pred_check
      _
    $region7: #{tpu_custom_call.1} parent=1 // pred_check_branch
      %27 = sbr.rel (0) target = $region9
    $region8: #{tpu_custom_call.1} parent=1 // pred_region
      %s29 = ssub.s32 12544, 12544
      %30 = vsyncadd [#allocation6], %s29
      %s31 = sshll.u32 [#allocation5], 4
      %s32 = int_to_ptr.vmem [resolvable:$true] %s31
      %37 = dma.hbm_to_vmem [thread:$0]  %s1, 12544, %s32, [#allocation6], 128, 128, 8
    $region9: #{tpu_custom_call.1} parent=1 // pred_fallthru
      _
    // Predicated region
    $region10: #{tpu_custom_call.1} parent=1 // pred_check
      _
    $region11: #{tpu_custom_call.1} parent=1 // pred_check_branch
      %39 = sbr.rel (0) target = $region13
    $region12: #{tpu_custom_call.1} parent=1 // pred_region
      _
    $region13: #{tpu_custom_call.1} parent=1 // pred_fallthru
      _
    // Predicated region
    $region14: #{tpu_custom_call.1} parent=1 // pred_check
      _
    $region15: #{tpu_custom_call.1} parent=1 // pred_check_branch
      %41 = sbr.rel (0) target = $region17
    $region16: #{tpu_custom_call.1} parent=1 // pred_region
      %s43 = ssub.s32 2048, 2048
      %44 = vsyncadd [#allocation6], %s43
      %s45 = sshll.u32 [#allocation7], 4
      %s46 = int_to_ptr.vmem [resolvable:$true] %s45
      %51 = dma.hbm_to_vmem [thread:$0]  %s3, 2048, %s46, [#allocation6], 128, 128, 8
    $region17: #{tpu_custom_call.1} parent=1 // pred_fallthru
      _
    // Predicated region
    $region18: #{tpu_custom_call.1} parent=1 // pred_check
      _
    $region19: #{tpu_custom_call.1} parent=1 // pred_check_branch
      %53 = sbr.rel (0) target = $region21
    $region20: #{tpu_custom_call.1} parent=1 // pred_region
      _
    $region21: #{tpu_custom_call.1} parent=1 // pred_fallthru
      _
    // Predicated region
    $region22: #{tpu_custom_call.1} parent=1 // pred_check
      _
    $region23: #{tpu_custom_call.1} parent=1 // pred_check_branch
      %55 = sbr.rel (0) target = $region25
    $region24: #{tpu_custom_call.1} parent=1 // pred_region
      %s57 = ssub.s32 2048, 2048
      %58 = vsyncadd [#allocation9], %s57
      %s59 = sshll.u32 [#allocation8], 4
      %s60 = int_to_ptr.vmem [resolvable:$true] %s59
      %65 = dma.hbm_to_vmem [thread:$0]  %s5, 2048, %s60, [#allocation9], 128, 128, 8
    $region25: #{tpu_custom_call.1} parent=1 // pred_fallthru
      _
    // Predicated region
    $region26: #{tpu_custom_call.1} parent=1 // pred_check
      _
    $region27: #{tpu_custom_call.1} parent=1 // pred_check_branch
      %67 = sbr.rel (0) target = $region29
    $region28: #{tpu_custom_call.1} parent=1 // pred_region
      _
    $region29: #{tpu_custom_call.1} parent=1 // pred_fallthru
      _
    // Predicated region
    $region30: #{tpu_custom_call.1} parent=1 // pred_check
      _
    $region31: #{tpu_custom_call.1} parent=1 // pred_check_branch
      %69 = sbr.rel (0) target = $region33
    $region32: #{tpu_custom_call.1} parent=1 // pred_region
      %70 = dma.done [#allocation3], 224
    $region33: #{tpu_custom_call.1} parent=1 // pred_fallthru
      _
    // Predicated region
    $region34: #{tpu_custom_call.1} parent=1 // pred_check
      _
    $region35: #{tpu_custom_call.1} parent=1 // pred_check_branch
      %72 = sbr.rel (0) target = $region37
    $region36: #{tpu_custom_call.1} parent=1 // pred_region
      %73 = dma.done [#allocation6], 12544
    $region37: #{tpu_custom_call.1} parent=1 // pred_fallthru
      _
    // Predicated region
    $region38: #{tpu_custom_call.1} parent=1 // pred_check
      _
    $region39: #{tpu_custom_call.1} parent=1 // pred_check_branch
      %75 = sbr.rel (0) target = $region41
    $region40: #{tpu_custom_call.1} parent=1 // pred_region
      %76 = dma.done [#allocation6], 2048
    $region41: #{tpu_custom_call.1} parent=1 // pred_fallthru
      _
    // Predicated region
    $region42: #{tpu_custom_call.1} parent=1 // pred_check
      _
    $region43: #{tpu_custom_call.1} parent=1 // pred_check_branch
      %78 = sbr.rel (0) target = $region45
    $region44: #{tpu_custom_call.1} parent=1 // pred_region
      %79 = dma.done [#allocation9], 2048
    $region45: #{tpu_custom_call.1} parent=1 // pred_fallthru
      _
    %v80 = vld [vmem:[#allocation2] sm:$0xff]
    %v81 = vld [vmem:[#allocation2 + $0x8] sm:$0x3f]
    %v82 = vld [vmem:[#allocation5] sm:$0xff]
    %v83 = vld [vmem:[#allocation5 + $0x8] sm:$0xff]
    %v84 = vld [vmem:[#allocation5 + $0x10] sm:$0xff]
    %v85 = vld [vmem:[#allocation5 + $0x18] sm:$0xff]
    %v86 = vld [vmem:[#allocation5 + $0x20] sm:$0xff]
    %v87 = vld [vmem:[#allocation5 + $0x28] sm:$0xff]
    %v88 = vld [vmem:[#allocation5 + $0x30] sm:$0xff]
    %v89 = vld [vmem:[#allocation5 + $0x38] sm:$0xff]
    %v90 = vld [vmem:[#allocation5 + $0x40] sm:$0xff]
    %v91 = vld [vmem:[#allocation5 + $0x48] sm:$0xff]
    %v92 = vld [vmem:[#allocation5 + $0x50] sm:$0xff]
    %v93 = vld [vmem:[#allocation5 + $0x58] sm:$0xff]
    %v94 = vld [vmem:[#allocation5 + $0x60] sm:$0xff]
    %v95 = vld [vmem:[#allocation5 + $0x68] sm:$0xff]
    %v96 = vld [vmem:[#allocation5 + $0x70] sm:$0xff]
    %v97 = vld [vmem:[#allocation5 + $0x78] sm:$0xff]
    %v98 = vld [vmem:[#allocation5 + $0x80] sm:$0xff]
    %v99 = vld [vmem:[#allocation5 + $0x88] sm:$0xff]
    %v100 = vld [vmem:[#allocation5 + $0x90] sm:$0xff]
    %v101 = vld [vmem:[#allocation5 + $0x98] sm:$0xff]
    %v102 = vld [vmem:[#allocation5 + $0xa0] sm:$0xff]
    %v103 = vld [vmem:[#allocation5 + $0xa8] sm:$0xff]
    %v104 = vld [vmem:[#allocation5 + $0xb0] sm:$0xff]
    %v105 = vld [vmem:[#allocation5 + $0xb8] sm:$0xff]
    %v106 = vld [vmem:[#allocation5 + $0xc0] sm:$0xff]
    %v107 = vld [vmem:[#allocation5 + $0xc8] sm:$0xff]
    %v108 = vld [vmem:[#allocation5 + $0xd0] sm:$0xff]
    %v109 = vld [vmem:[#allocation5 + $0xd8] sm:$0xff]
    %v110 = vld [vmem:[#allocation5 + $0xe0] sm:$0xff]
    %v111 = vld [vmem:[#allocation5 + $0xe8] sm:$0xff]
    %v112 = vld [vmem:[#allocation5 + $0xf0] sm:$0xff]
    %v113 = vld [vmem:[#allocation5 + $0xf8] sm:$0xff]
    %v114 = vld [vmem:[#allocation5 + $0x100] sm:$0xff]
    %v115 = vld [vmem:[#allocation5 + $0x108] sm:$0xff]
    %v116 = vld [vmem:[#allocation5 + $0x110] sm:$0xff]
    %v117 = vld [vmem:[#allocation5 + $0x118] sm:$0xff]
    %v118 = vld [vmem:[#allocation5 + $0x120] sm:$0xff]
    %v119 = vld [vmem:[#allocation5 + $0x128] sm:$0xff]
    %v120 = vld [vmem:[#allocation5 + $0x130] sm:$0xff]
    %v121 = vld [vmem:[#allocation5 + $0x138] sm:$0xff]
    %v122 = vld [vmem:[#allocation5 + $0x140] sm:$0xff]
    %v123 = vld [vmem:[#allocation5 + $0x148] sm:$0xff]
    %v124 = vld [vmem:[#allocation5 + $0x150] sm:$0xff]
    %v125 = vld [vmem:[#allocation5 + $0x158] sm:$0xff]
    %v126 = vld [vmem:[#allocation5 + $0x160] sm:$0xff]
    %v127 = vld [vmem:[#allocation5 + $0x168] sm:$0xff]
    %v128 = vld [vmem:[#allocation5 + $0x170] sm:$0xff]
    %v129 = vld [vmem:[#allocation5 + $0x178] sm:$0xff]
    %v130 = vld [vmem:[#allocation5 + $0x180] sm:$0xff]
    %v131 = vld [vmem:[#allocation5 + $0x188] sm:$0xff]
    %v132 = vld [vmem:[#allocation5 + $0x190] sm:$0xff]
    %v133 = vld [vmem:[#allocation5 + $0x198] sm:$0xff]
    %v134 = vld [vmem:[#allocation5 + $0x1a0] sm:$0xff]
    %v135 = vld [vmem:[#allocation5 + $0x1a8] sm:$0xff]
    %v136 = vld [vmem:[#allocation5 + $0x1b0] sm:$0xff]
    %v137 = vld [vmem:[#allocation5 + $0x1b8] sm:$0xff]
    %v138 = vld [vmem:[#allocation5 + $0x1c0] sm:$0xff]
    %v139 = vld [vmem:[#allocation5 + $0x1c8] sm:$0xff]
    %v140 = vld [vmem:[#allocation5 + $0x1d0] sm:$0xff]
    %v141 = vld [vmem:[#allocation5 + $0x1d8] sm:$0xff]
    %v142 = vld [vmem:[#allocation5 + $0x1e0] sm:$0xff]
    %v143 = vld [vmem:[#allocation5 + $0x1e8] sm:$0xff]
    %v144 = vld [vmem:[#allocation5 + $0x1f0] sm:$0xff]
    %v145 = vld [vmem:[#allocation5 + $0x1f8] sm:$0xff]
    %v146 = vld [vmem:[#allocation5 + $0x200] sm:$0xff]
    %v147 = vld [vmem:[#allocation5 + $0x208] sm:$0xff]
    %v148 = vld [vmem:[#allocation5 + $0x210] sm:$0xff]
    %v149 = vld [vmem:[#allocation5 + $0x218] sm:$0xff]
    %v150 = vld [vmem:[#allocation5 + $0x220] sm:$0xff]
    %v151 = vld [vmem:[#allocation5 + $0x228] sm:$0xff]
    %v152 = vld [vmem:[#allocation5 + $0x230] sm:$0xff]
    %v153 = vld [vmem:[#allocation5 + $0x238] sm:$0xff]
    %v154 = vld [vmem:[#allocation5 + $0x240] sm:$0xff]
    %v155 = vld [vmem:[#allocation5 + $0x248] sm:$0xff]
    %v156 = vld [vmem:[#allocation5 + $0x250] sm:$0xff]
    %v157 = vld [vmem:[#allocation5 + $0x258] sm:$0xff]
    %v158 = vld [vmem:[#allocation5 + $0x260] sm:$0xff]
    %v159 = vld [vmem:[#allocation5 + $0x268] sm:$0xff]
    %v160 = vld [vmem:[#allocation5 + $0x270] sm:$0xff]
    %v161 = vld [vmem:[#allocation5 + $0x278] sm:$0xff]
    %v162 = vld [vmem:[#allocation5 + $0x280] sm:$0xff]
    %v163 = vld [vmem:[#allocation5 + $0x288] sm:$0xff]
    %v164 = vld [vmem:[#allocation5 + $0x290] sm:$0xff]
    %v165 = vld [vmem:[#allocation5 + $0x298] sm:$0xff]
    %v166 = vld [vmem:[#allocation5 + $0x2a0] sm:$0xff]
    %v167 = vld [vmem:[#allocation5 + $0x2a8] sm:$0xff]
    %v168 = vld [vmem:[#allocation5 + $0x2b0] sm:$0xff]
    %v169 = vld [vmem:[#allocation5 + $0x2b8] sm:$0xff]
    %v170 = vld [vmem:[#allocation5 + $0x2c0] sm:$0xff]
    %v171 = vld [vmem:[#allocation5 + $0x2c8] sm:$0xff]
    %v172 = vld [vmem:[#allocation5 + $0x2d0] sm:$0xff]
    %v173 = vld [vmem:[#allocation5 + $0x2d8] sm:$0xff]
    %v174 = vld [vmem:[#allocation5 + $0x2e0] sm:$0xff]
    %v175 = vld [vmem:[#allocation5 + $0x2e8] sm:$0xff]
    %v176 = vld [vmem:[#allocation5 + $0x2f0] sm:$0xff]
    %v177 = vld [vmem:[#allocation5 + $0x2f8] sm:$0xff]
    %v178 = vld [vmem:[#allocation5 + $0x300] sm:$0xff]
    %v179 = vld [vmem:[#allocation5 + $0x308] sm:$0xff]
    %v180 = vld [vmem:[%s2] sm:$0x1]
    %v182 = vlaneseq
    %v183 = vshrl.u32 %v182, 7
    %v184 = vsub.s32 0, %v183
    %v185 = vrot.slane %v180, %v184
    %v189 = vcombine.high %v80, %v80
    %v191 = vunpack.c.l.s4 1983009808
    %v192 = vunpack.c.0.s8 %v191
    %v193 = vlaneseq
    %v194 = vshrl.u32 %v193, 7
    %v195 = vsub.s32 %v192, %v194
    %v196 = vrot.slane %v80, %v195
    %v198 = vunpack.c.l.s4 1983009808
    %v199 = vunpack.c.0.s8 %v198
    %v200 = vlaneseq
    %v201 = vshrl.u32 %v200, 7
    %v202 = vsub.s32 %v199, %v201
    %v203 = vrot.slane %v189, %v202
    %v204 = vcombine.high %v196, %v196
    %v205 = vcombine.high %v203, %v203
    %v206 = vcombine.high %v81, %v81
    %v208 = vunpack.c.l.s4 1983009808
    %v209 = vunpack.c.0.s8 %v208
    %v210 = vlaneseq
    %v211 = vshrl.u32 %v210, 7
    %v212 = vsub.s32 %v209, %v211
    %v213 = vrot.slane %v81, %v212
    %v215 = vunpack.c.l.s4 1983009808
    %v216 = vunpack.c.0.s8 %v215
    %v217 = vlaneseq
    %v218 = vshrl.u32 %v217, 7
    %v219 = vsub.s32 %v216, %v218
    %v220 = vrot.slane %v206, %v219
    %v221 = vcombine.high %v213, %v213
    %vm228 = vcmask 130048
    %v229 = vsel %vm228, %v220, 0
    %231 = vmatprep.subr.mxu0 0.0
    %232 = vmatpush1.msra.mxu0 %v97
    %233 = vmatprep.subr.mxu0 0.0
    %234 = vmatpush1.msra.mxu0 %v96
    %235 = vmatprep.subr.mxu0 0.0
    %236 = vmatpush1.msra.mxu0 %v95
    %237 = vmatprep.subr.mxu0 0.0
    %238 = vmatpush1.msra.mxu0 %v94
    %239 = vmatprep.subr.mxu0 0.0
    %240 = vmatpush1.msra.mxu0 %v93
    %241 = vmatprep.subr.mxu0 0.0
    %242 = vmatpush1.msra.mxu0 %v92
    %243 = vmatprep.subr.mxu0 0.0
    %244 = vmatpush1.msra.mxu0 %v91
    %245 = vmatprep.subr.mxu0 0.0
    %246 = vmatpush1.msra.mxu0 %v90
    %247 = vmatprep.subr.mxu0 0.0
    %248 = vmatpush1.msra.mxu0 %v89
    %249 = vmatprep.subr.mxu0 0.0
    %250 = vmatpush1.msra.mxu0 %v88
    %251 = vmatprep.subr.mxu0 0.0
    %252 = vmatpush1.msra.mxu0 %v87
    %253 = vmatprep.subr.mxu0 0.0
    %254 = vmatpush1.msra.mxu0 %v86
    %255 = vmatprep.subr.mxu0 0.0
    %256 = vmatpush1.msra.mxu0 %v85
    %257 = vmatprep.subr.mxu0 0.0
    %258 = vmatpush1.msra.mxu0 %v84
    %259 = vmatprep.subr.mxu0 0.0
    %260 = vmatpush1.msra.mxu0 %v83
    %261 = vmatprep.subr.mxu0 0.0
    %262 = vmatpush1.msra.mxu0 %v82
    %263 = vmatprep.subr.mxu0 0.0
    %264 = vmatpush2.msra.mxu0 %v113
    %265 = vmatprep.subr.mxu0 0.0
    %266 = vmatpush2.msra.mxu0 %v112
    %267 = vmatprep.subr.mxu0 0.0
    %268 = vmatpush2.msra.mxu0 %v111
    %269 = vmatprep.subr.mxu0 0.0
    %270 = vmatpush2.msra.mxu0 %v110
    %271 = vmatprep.subr.mxu0 0.0
    %272 = vmatpush2.msra.mxu0 %v109
    %273 = vmatprep.subr.mxu0 0.0
    %274 = vmatpush2.msra.mxu0 %v108
    %275 = vmatprep.subr.mxu0 0.0
    %276 = vmatpush2.msra.mxu0 %v107
    %277 = vmatprep.subr.mxu0 0.0
    %278 = vmatpush2.msra.mxu0 %v106
    %279 = vmatprep.subr.mxu0 0.0
    %280 = vmatpush2.msra.mxu0 %v105
    %281 = vmatprep.subr.mxu0 0.0
    %282 = vmatpush2.msra.mxu0 %v104
    %283 = vmatprep.subr.mxu0 0.0
    %284 = vmatpush2.msra.mxu0 %v103
    %285 = vmatprep.subr.mxu0 0.0
    %286 = vmatpush2.msra.mxu0 %v102
    %287 = vmatprep.subr.mxu0 0.0
    %288 = vmatpush2.msra.mxu0 %v101
    %289 = vmatprep.subr.mxu0 0.0
    %290 = vmatpush2.msra.mxu0 %v100
    %291 = vmatprep.subr.mxu0 0.0
    %292 = vmatpush2.msra.mxu0 %v99
    %293 = vmatprep.subr.mxu0 0.0
    %294 = vmatpush2.msra.mxu0 %v98
    %295 = vmatprep.mubr.f32.mxu0 %v204
    %296 = vmatmul.mubr.f32.gmra.mxu0 %v196
    %v297 = vpop.f32.mrf.mxu0
    %v298 = vadd.f32 %v185, %v297
    %v299 = vpop.f32.mrf.mxu0
    %300 = vdwg.mxu0
    %301 = vmatprep.subr.mxu0 0.0
    %302 = vmatpush1.msra.mxu0 %v129
    %303 = vmatprep.subr.mxu0 0.0
    %304 = vmatpush1.msra.mxu0 %v128
    %305 = vmatprep.subr.mxu0 0.0
    %306 = vmatpush1.msra.mxu0 %v127
    %307 = vmatprep.subr.mxu0 0.0
    %308 = vmatpush1.msra.mxu0 %v126
    %309 = vmatprep.subr.mxu0 0.0
    %310 = vmatpush1.msra.mxu0 %v125
    %311 = vmatprep.subr.mxu0 0.0
    %312 = vmatpush1.msra.mxu0 %v124
    %313 = vmatprep.subr.mxu0 0.0
    %314 = vmatpush1.msra.mxu0 %v123
    %315 = vmatprep.subr.mxu0 0.0
    %316 = vmatpush1.msra.mxu0 %v122
    %317 = vmatprep.subr.mxu0 0.0
    %318 = vmatpush1.msra.mxu0 %v121
    %319 = vmatprep.subr.mxu0 0.0
    %320 = vmatpush1.msra.mxu0 %v120
    %321 = vmatprep.subr.mxu0 0.0
    %322 = vmatpush1.msra.mxu0 %v119
    %323 = vmatprep.subr.mxu0 0.0
    %324 = vmatpush1.msra.mxu0 %v118
    %325 = vmatprep.subr.mxu0 0.0
    %326 = vmatpush1.msra.mxu0 %v117
    %327 = vmatprep.subr.mxu0 0.0
    %328 = vmatpush1.msra.mxu0 %v116
    %329 = vmatprep.subr.mxu0 0.0
    %330 = vmatpush1.msra.mxu0 %v115
    %331 = vmatprep.subr.mxu0 0.0
    %332 = vmatpush1.msra.mxu0 %v114
    %333 = vmatprep.subr.mxu0 0.0
    %334 = vmatpush2.msra.mxu0 %v145
    %335 = vmatprep.subr.mxu0 0.0
    %336 = vmatpush2.msra.mxu0 %v144
    %337 = vmatprep.subr.mxu0 0.0
    %338 = vmatpush2.msra.mxu0 %v143
    %339 = vmatprep.subr.mxu0 0.0
    %340 = vmatpush2.msra.mxu0 %v142
    %341 = vmatprep.subr.mxu0 0.0
    %342 = vmatpush2.msra.mxu0 %v141
    %343 = vmatprep.subr.mxu0 0.0
    %344 = vmatpush2.msra.mxu0 %v140
    %345 = vmatprep.subr.mxu0 0.0
    %346 = vmatpush2.msra.mxu0 %v139
    %347 = vmatprep.subr.mxu0 0.0
    %348 = vmatpush2.msra.mxu0 %v138
    %349 = vmatprep.subr.mxu0 0.0
    %350 = vmatpush2.msra.mxu0 %v137
    %351 = vmatprep.subr.mxu0 0.0
    %352 = vmatpush2.msra.mxu0 %v136
    %353 = vmatprep.subr.mxu0 0.0
    %354 = vmatpush2.msra.mxu0 %v135
    %355 = vmatprep.subr.mxu0 0.0
    %356 = vmatpush2.msra.mxu0 %v134
    %357 = vmatprep.subr.mxu0 0.0
    %358 = vmatpush2.msra.mxu0 %v133
    %359 = vmatprep.subr.mxu0 0.0
    %360 = vmatpush2.msra.mxu0 %v132
    %361 = vmatprep.subr.mxu0 0.0
    %362 = vmatpush2.msra.mxu0 %v131
    %363 = vmatprep.subr.mxu0 0.0
    %364 = vmatpush2.msra.mxu0 %v130
    %365 = vmatprep.mubr.f32.mxu0 %v205
    %366 = vmatmul.mubr.f32.gmra.mxu0 %v203
    %v367 = vpop.f32.mrf.mxu0
    %v368 = vadd.f32 %v298, %v367
    %v369 = vpop.f32.mrf.mxu0
    %370 = vdwg.mxu0
    %371 = vmatprep.subr.mxu0 0.0
    %372 = vmatpush1.msra.mxu0 %v161
    %373 = vmatprep.subr.mxu0 0.0
    %374 = vmatpush1.msra.mxu0 %v160
    %375 = vmatprep.subr.mxu0 0.0
    %376 = vmatpush1.msra.mxu0 %v159
    %377 = vmatprep.subr.mxu0 0.0
    %378 = vmatpush1.msra.mxu0 %v158
    %379 = vmatprep.subr.mxu0 0.0
    %380 = vmatpush1.msra.mxu0 %v157
    %381 = vmatprep.subr.mxu0 0.0
    %382 = vmatpush1.msra.mxu0 %v156
    %383 = vmatprep.subr.mxu0 0.0
    %384 = vmatpush1.msra.mxu0 %v155
    %385 = vmatprep.subr.mxu0 0.0
    %386 = vmatpush1.msra.mxu0 %v154
    %387 = vmatprep.subr.mxu0 0.0
    %388 = vmatpush1.msra.mxu0 %v153
    %389 = vmatprep.subr.mxu0 0.0
    %390 = vmatpush1.msra.mxu0 %v152
    %391 = vmatprep.subr.mxu0 0.0
    %392 = vmatpush1.msra.mxu0 %v151
    %393 = vmatprep.subr.mxu0 0.0
    %394 = vmatpush1.msra.mxu0 %v150
    %395 = vmatprep.subr.mxu0 0.0
    %396 = vmatpush1.msra.mxu0 %v149
    %397 = vmatprep.subr.mxu0 0.0
    %398 = vmatpush1.msra.mxu0 %v148
    %399 = vmatprep.subr.mxu0 0.0
    %400 = vmatpush1.msra.mxu0 %v147
    %401 = vmatprep.subr.mxu0 0.0
    %402 = vmatpush1.msra.mxu0 %v146
    %403 = vmatprep.subr.mxu0 0.0
    %404 = vmatpush2.msra.mxu0 %v177
    %405 = vmatprep.subr.mxu0 0.0
    %406 = vmatpush2.msra.mxu0 %v176
    %407 = vmatprep.subr.mxu0 0.0
    %408 = vmatpush2.msra.mxu0 %v175
    %409 = vmatprep.subr.mxu0 0.0
    %410 = vmatpush2.msra.mxu0 %v174
    %411 = vmatprep.subr.mxu0 0.0
    %412 = vmatpush2.msra.mxu0 %v173
    %413 = vmatprep.subr.mxu0 0.0
    %414 = vmatpush2.msra.mxu0 %v172
    %415 = vmatprep.subr.mxu0 0.0
    %416 = vmatpush2.msra.mxu0 %v171
    %417 = vmatprep.subr.mxu0 0.0
    %418 = vmatpush2.msra.mxu0 %v170
    %419 = vmatprep.subr.mxu0 0.0
    %420 = vmatpush2.msra.mxu0 %v169
    %421 = vmatprep.subr.mxu0 0.0
    %422 = vmatpush2.msra.mxu0 %v168
    %423 = vmatprep.subr.mxu0 0.0
    %424 = vmatpush2.msra.mxu0 %v167
    %425 = vmatprep.subr.mxu0 0.0
    %426 = vmatpush2.msra.mxu0 %v166
    %427 = vmatprep.subr.mxu0 0.0
    %428 = vmatpush2.msra.mxu0 %v165
    %429 = vmatprep.subr.mxu0 0.0
    %430 = vmatpush2.msra.mxu0 %v164
    %431 = vmatprep.subr.mxu0 0.0
    %432 = vmatpush2.msra.mxu0 %v163
    %433 = vmatprep.subr.mxu0 0.0
    %434 = vmatpush2.msra.mxu0 %v162
    %435 = vmatprep.mubr.f32.mxu0 %v221
    %436 = vmatmul.mubr.f32.gmra.mxu0 %v213
    %v437 = vpop.f32.mrf.mxu0
    %v438 = vadd.f32 %v368, %v437
    %v439 = vpop.f32.mrf.mxu0
    %440 = vdwg.mxu0
    %441 = vmatprep.subr.mxu0 0.0
    %442 = vmatpush1.msra.mxu0 0.0
    %443 = vmatprep.subr.mxu0 0.0
    %444 = vmatpush1.msra.mxu0 0.0
    %445 = vmatprep.subr.mxu0 0.0
    %446 = vmatpush1.msra.mxu0 0.0
    %447 = vmatprep.subr.mxu0 0.0
    %448 = vmatpush1.msra.mxu0 0.0
    %449 = vmatprep.subr.mxu0 0.0
    %450 = vmatpush1.msra.mxu0 0.0
    %451 = vmatprep.subr.mxu0 0.0
    %452 = vmatpush1.msra.mxu0 0.0
    %453 = vmatprep.subr.mxu0 0.0
    %454 = vmatpush1.msra.mxu0 0.0
    %455 = vmatprep.subr.mxu0 0.0
    %456 = vmatpush1.msra.mxu0 0.0
    %457 = vmatprep.subr.mxu0 0.0
    %458 = vmatpush1.msra.mxu0 0.0
    %459 = vmatprep.subr.mxu0 0.0
    %460 = vmatpush1.msra.mxu0 0.0
    %461 = vmatprep.subr.mxu0 0.0
    %462 = vmatpush1.msra.mxu0 0.0
    %463 = vmatprep.subr.mxu0 0.0
    %464 = vmatpush1.msra.mxu0 0.0
    %465 = vmatprep.subr.mxu0 0.0
    %466 = vmatpush1.msra.mxu0 0.0
    %467 = vmatprep.subr.mxu0 0.0
    %468 = vmatpush1.msra.mxu0 0.0
    %469 = vmatprep.subr.mxu0 0.0
    %470 = vmatpush1.msra.mxu0 %v179
    %471 = vmatprep.subr.mxu0 0.0
    %472 = vmatpush1.msra.mxu0 %v178
    %473 = vmatprep.subr.mxu0 0.0
    %474 = vmatpush2.msra.mxu0 0.0
    %475 = vmatprep.subr.mxu0 0.0
    %476 = vmatpush2.msra.mxu0 0.0
    %477 = vmatprep.subr.mxu0 0.0
    %478 = vmatpush2.msra.mxu0 0.0
    %479 = vmatprep.subr.mxu0 0.0
    %480 = vmatpush2.msra.mxu0 0.0
    %481 = vmatprep.subr.mxu0 0.0
    %482 = vmatpush2.msra.mxu0 0.0
    %483 = vmatprep.subr.mxu0 0.0
    %484 = vmatpush2.msra.mxu0 0.0
    %485 = vmatprep.subr.mxu0 0.0
    %486 = vmatpush2.msra.mxu0 0.0
    %487 = vmatprep.subr.mxu0 0.0
    %488 = vmatpush2.msra.mxu0 0.0
    %489 = vmatprep.subr.mxu0 0.0
    %490 = vmatpush2.msra.mxu0 0.0
    %491 = vmatprep.subr.mxu0 0.0
    %492 = vmatpush2.msra.mxu0 0.0
    %493 = vmatprep.subr.mxu0 0.0
    %494 = vmatpush2.msra.mxu0 0.0
    %495 = vmatprep.subr.mxu0 0.0
    %496 = vmatpush2.msra.mxu0 0.0
    %497 = vmatprep.subr.mxu0 0.0
    %498 = vmatpush2.msra.mxu0 0.0
    %499 = vmatprep.subr.mxu0 0.0
    %500 = vmatpush2.msra.mxu0 0.0
    %501 = vmatprep.subr.mxu0 0.0
    %502 = vmatpush2.msra.mxu0 0.0
    %503 = vmatprep.subr.mxu0 0.0
    %504 = vmatpush2.msra.mxu0 0.0
    %505 = vmatprep.mubr.f32.mxu0 0.0
    %506 = vmatmul.mubr.f32.gmra.mxu0 %v229
    %v507 = vpop.f32.mrf.mxu0
    %v508 = vadd.f32 %v438, %v507
    %v509 = vpop.f32.mrf.mxu0
    %510 = vdwg.mxu0
    %v511 = vmax.f32 %v508, 0.0
    %v512 = vld [vmem:[#allocation7] sm:$0xff]
    %v513 = vld [vmem:[#allocation7 + $0x8] sm:$0xff]
    %v514 = vld [vmem:[#allocation7 + $0x10] sm:$0xff]
    %v515 = vld [vmem:[#allocation7 + $0x18] sm:$0xff]
    %v516 = vld [vmem:[#allocation7 + $0x20] sm:$0xff]
    %v517 = vld [vmem:[#allocation7 + $0x28] sm:$0xff]
    %v518 = vld [vmem:[#allocation7 + $0x30] sm:$0xff]
    %v519 = vld [vmem:[#allocation7 + $0x38] sm:$0xff]
    %v520 = vld [vmem:[#allocation7 + $0x40] sm:$0xff]
    %v521 = vld [vmem:[#allocation7 + $0x48] sm:$0xff]
    %v522 = vld [vmem:[#allocation7 + $0x50] sm:$0xff]
    %v523 = vld [vmem:[#allocation7 + $0x58] sm:$0xff]
    %v524 = vld [vmem:[#allocation7 + $0x60] sm:$0xff]
    %v525 = vld [vmem:[#allocation7 + $0x68] sm:$0xff]
    %v526 = vld [vmem:[#allocation7 + $0x70] sm:$0xff]
    %v527 = vld [vmem:[#allocation7 + $0x78] sm:$0xff]
    %v528 = vld [vmem:[%s4] sm:$0x1]
    %v530 = vlaneseq
    %v531 = vshrl.u32 %v530, 7
    %v532 = vsub.s32 0, %v531
    %v533 = vrot.slane %v528, %v532
    %535 = vmatprep.subr.mxu0 0.0
    %536 = vmatpush1.msra.mxu0 %v527
    %537 = vmatprep.subr.mxu0 0.0
    %538 = vmatpush1.msra.mxu0 %v526
    %539 = vmatprep.subr.mxu0 0.0
    %540 = vmatpush1.msra.mxu0 %v525
    %541 = vmatprep.subr.mxu0 0.0
    %542 = vmatpush1.msra.mxu0 %v524
    %543 = vmatprep.subr.mxu0 0.0
    %544 = vmatpush1.msra.mxu0 %v523
    %545 = vmatprep.subr.mxu0 0.0
    %546 = vmatpush1.msra.mxu0 %v522
    %547 = vmatprep.subr.mxu0 0.0
    %548 = vmatpush1.msra.mxu0 %v521
    %549 = vmatprep.subr.mxu0 0.0
    %550 = vmatpush1.msra.mxu0 %v520
    %551 = vmatprep.subr.mxu0 0.0
    %552 = vmatpush1.msra.mxu0 %v519
    %553 = vmatprep.subr.mxu0 0.0
    %554 = vmatpush1.msra.mxu0 %v518
    %555 = vmatprep.subr.mxu0 0.0
    %556 = vmatpush1.msra.mxu0 %v517
    %557 = vmatprep.subr.mxu0 0.0
    %558 = vmatpush1.msra.mxu0 %v516
    %559 = vmatprep.subr.mxu0 0.0
    %560 = vmatpush1.msra.mxu0 %v515
    %561 = vmatprep.subr.mxu0 0.0
    %562 = vmatpush1.msra.mxu0 %v514
    %563 = vmatprep.subr.mxu0 0.0
    %564 = vmatpush1.msra.mxu0 %v513
    %565 = vmatprep.subr.mxu0 0.0
    %566 = vmatpush1.msra.mxu0 %v512
    %567 = vmatprep.subr.mxu0 0.0
    %568 = vmatpush2.msra.mxu0 0.0
    %569 = vmatprep.subr.mxu0 0.0
    %570 = vmatpush2.msra.mxu0 0.0
    %571 = vmatprep.subr.mxu0 0.0
    %572 = vmatpush2.msra.mxu0 0.0
    %573 = vmatprep.subr.mxu0 0.0
    %574 = vmatpush2.msra.mxu0 0.0
    %575 = vmatprep.subr.mxu0 0.0
    %576 = vmatpush2.msra.mxu0 0.0
    %577 = vmatprep.subr.mxu0 0.0
    %578 = vmatpush2.msra.mxu0 0.0
    %579 = vmatprep.subr.mxu0 0.0
    %580 = vmatpush2.msra.mxu0 0.0
    %581 = vmatprep.subr.mxu0 0.0
    %582 = vmatpush2.msra.mxu0 0.0
    %583 = vmatprep.subr.mxu0 0.0
    %584 = vmatpush2.msra.mxu0 0.0
    %585 = vmatprep.subr.mxu0 0.0
    %586 = vmatpush2.msra.mxu0 0.0
    %587 = vmatprep.subr.mxu0 0.0
    %588 = vmatpush2.msra.mxu0 0.0
    %589 = vmatprep.subr.mxu0 0.0
    %590 = vmatpush2.msra.mxu0 0.0
    %591 = vmatprep.subr.mxu0 0.0
    %592 = vmatpush2.msra.mxu0 0.0
    %593 = vmatprep.subr.mxu0 0.0
    %594 = vmatpush2.msra.mxu0 0.0
    %595 = vmatprep.subr.mxu0 0.0
    %596 = vmatpush2.msra.mxu0 0.0
    %597 = vmatprep.subr.mxu0 0.0
    %598 = vmatpush2.msra.mxu0 0.0
    %599 = vmatprep.mubr.f32.mxu0 0.0
    %600 = vmatmul.mubr.f32.gmra.mxu0 %v511
    %v601 = vpop.f32.mrf.mxu0
    %v602 = vadd.f32 %v533, %v601
    %v603 = vpop.f32.mrf.mxu0
    %604 = vdwg.mxu0
    %v605 = vmax.f32 %v602, 0.0
    %v606 = vld [vmem:[#allocation8] sm:$0xff]
    %v607 = vld [vmem:[#allocation8 + $0x8] sm:$0xff]
    %v608 = vld [vmem:[#allocation8 + $0x10] sm:$0xff]
    %v609 = vld [vmem:[#allocation8 + $0x18] sm:$0xff]
    %v610 = vld [vmem:[#allocation8 + $0x20] sm:$0xff]
    %v611 = vld [vmem:[#allocation8 + $0x28] sm:$0xff]
    %v612 = vld [vmem:[#allocation8 + $0x30] sm:$0xff]
    %v613 = vld [vmem:[#allocation8 + $0x38] sm:$0xff]
    %v614 = vld [vmem:[#allocation8 + $0x40] sm:$0xff]
    %v615 = vld [vmem:[#allocation8 + $0x48] sm:$0xff]
    %v616 = vld [vmem:[#allocation8 + $0x50] sm:$0xff]
    %v617 = vld [vmem:[#allocation8 + $0x58] sm:$0xff]
    %v618 = vld [vmem:[#allocation8 + $0x60] sm:$0xff]
    %v619 = vld [vmem:[#allocation8 + $0x68] sm:$0xff]
    %v620 = vld [vmem:[#allocation8 + $0x70] sm:$0xff]
    %v621 = vld [vmem:[#allocation8 + $0x78] sm:$0xff]
    %v622 = vld [vmem:[%s6] sm:$0x1]
    %v624 = vlaneseq
    %v625 = vshrl.u32 %v624, 7
    %v626 = vsub.s32 0, %v625
    %v627 = vrot.slane %v622, %v626
    %629 = vmatprep.subr.mxu0 0.0
    %630 = vmatpush1.msra.mxu0 %v621
    %631 = vmatprep.subr.mxu0 0.0
    %632 = vmatpush1.msra.mxu0 %v620
    %633 = vmatprep.subr.mxu0 0.0
    %634 = vmatpush1.msra.mxu0 %v619
    %635 = vmatprep.subr.mxu0 0.0
    %636 = vmatpush1.msra.mxu0 %v618
    %637 = vmatprep.subr.mxu0 0.0
    %638 = vmatpush1.msra.mxu0 %v617
    %639 = vmatprep.subr.mxu0 0.0
    %640 = vmatpush1.msra.mxu0 %v616
    %641 = vmatprep.subr.mxu0 0.0
    %642 = vmatpush1.msra.mxu0 %v615
    %643 = vmatprep.subr.mxu0 0.0
    %644 = vmatpush1.msra.mxu0 %v614
    %645 = vmatprep.subr.mxu0 0.0
    %646 = vmatpush1.msra.mxu0 %v613
    %647 = vmatprep.subr.mxu0 0.0
    %648 = vmatpush1.msra.mxu0 %v612
    %649 = vmatprep.subr.mxu0 0.0
    %650 = vmatpush1.msra.mxu0 %v611
    %651 = vmatprep.subr.mxu0 0.0
    %652 = vmatpush1.msra.mxu0 %v610
    %653 = vmatprep.subr.mxu0 0.0
    %654 = vmatpush1.msra.mxu0 %v609
    %655 = vmatprep.subr.mxu0 0.0
    %656 = vmatpush1.msra.mxu0 %v608
    %657 = vmatprep.subr.mxu0 0.0
    %658 = vmatpush1.msra.mxu0 %v607
    %659 = vmatprep.subr.mxu0 0.0
    %660 = vmatpush1.msra.mxu0 %v606
    %661 = vmatprep.subr.mxu0 0.0
    %662 = vmatpush2.msra.mxu0 0.0
    %663 = vmatprep.subr.mxu0 0.0
    %664 = vmatpush2.msra.mxu0 0.0
    %665 = vmatprep.subr.mxu0 0.0
    %666 = vmatpush2.msra.mxu0 0.0
    %667 = vmatprep.subr.mxu0 0.0
    %668 = vmatpush2.msra.mxu0 0.0
    %669 = vmatprep.subr.mxu0 0.0
    %670 = vmatpush2.msra.mxu0 0.0
    %671 = vmatprep.subr.mxu0 0.0
    %672 = vmatpush2.msra.mxu0 0.0
    %673 = vmatprep.subr.mxu0 0.0
    %674 = vmatpush2.msra.mxu0 0.0
    %675 = vmatprep.subr.mxu0 0.0
    %676 = vmatpush2.msra.mxu0 0.0
    %677 = vmatprep.subr.mxu0 0.0
    %678 = vmatpush2.msra.mxu0 0.0
    %679 = vmatprep.subr.mxu0 0.0
    %680 = vmatpush2.msra.mxu0 0.0
    %681 = vmatprep.subr.mxu0 0.0
    %682 = vmatpush2.msra.mxu0 0.0
    %683 = vmatprep.subr.mxu0 0.0
    %684 = vmatpush2.msra.mxu0 0.0
    %685 = vmatprep.subr.mxu0 0.0
    %686 = vmatpush2.msra.mxu0 0.0
    %687 = vmatprep.subr.mxu0 0.0
    %688 = vmatpush2.msra.mxu0 0.0
    %689 = vmatprep.subr.mxu0 0.0
    %690 = vmatpush2.msra.mxu0 0.0
    %691 = vmatprep.subr.mxu0 0.0
    %692 = vmatpush2.msra.mxu0 0.0
    %693 = vmatprep.mubr.f32.mxu0 0.0
    %694 = vmatmul.mubr.f32.gmra.mxu0 %v605
    %v695 = vpop.f32.mrf.mxu0
    %v696 = vadd.f32 %v627, %v695
    %v697 = vpop.f32.mrf.mxu0
    %698 = vdwg.mxu0
    %699 = vst [vmem:[#allocation10] sm:$0x3] %v696
    // Predicated region
    $region46: #{tpu_custom_call.1} parent=1 // pred_check
      _
    $region47: #{tpu_custom_call.1} parent=1 // pred_check_branch
      %701 = sbr.rel (0) target = $region49
    $region48: #{tpu_custom_call.1} parent=1 // pred_region
      %s703 = ssub.s32 32, 32
      %704 = vsyncadd [#allocation4], %s703
      %s706 = sshll.u32 [#allocation10], 4
      %s707 = int_to_ptr.vmem [resolvable:$true] %s706
      %709 = dma.vmem_to_hbm [thread:$0]  %s707, 32, %s7, [#allocation4]
    $region49: #{tpu_custom_call.1} parent=1 // pred_fallthru
      _
    // Predicated region
    $region50: #{tpu_custom_call.1} parent=1 // pred_check
      _
    $region51: #{tpu_custom_call.1} parent=1 // pred_check_branch
      %711 = sbr.rel (0) target = $region53
    $region52: #{tpu_custom_call.1} parent=1 // pred_region
      %712 = dma.done [#allocation4], 32
    $region53: #{tpu_custom_call.1} parent=1 // pred_fallthru
      _
    %713 = vsyncpa [#allocation3], 1
    %714 = vsyncpa [#allocation6], 1
    %715 = vsyncpa [#allocation9], 1
    %716 = vsyncpa [#allocation4], 1

</llo_original>
